<compile_context>
chip_gen: v7x
topology: tpu7x:2x2x1
jax: 0.10.0
libtpu: 0.0.40
codegen_flags: <defaults>
</compile_context>

<pallas_src>
import functools

import jax
import jax.numpy as jnp
from jax import lax
from jax.experimental import pallas as pl
from jax.experimental.pallas import tpu as pltpu

_LANE = 128


def _lstm_fc_kernel(gx_ref, whh_ref, wfc_ref, bfc_ref, out_ref, h_sc, c_sc, *,
                    hidden_size, time_chunk):
    """One grid step == `time_chunk` LSTM timesteps. h/c persist in VMEM scratch."""
    H = hidden_size
    chunk = pl.program_id(0)

    @pl.when(chunk == 0)
    def _():
        h_sc[...] = jnp.zeros_like(h_sc)
        c_sc[...] = jnp.zeros_like(c_sc)
        out_ref[...] = jnp.zeros_like(out_ref)   # robust init of resident out block

    whh = whh_ref[...]                           # (H, 4H) — hoisted out of the loop
    B = h_sc.shape[0]

    # Lane-index mask selecting the g (cell candidate) gate block: apply the
    # nonlinearities once over the full lane-dense (B, 4H) vector.
    lane = lax.broadcasted_iota(jnp.int32, (B, 4 * H), 1)
    is_g = (lane >= 2 * H) & (lane < 3 * H)

    def step(t, carry):
        h_prev, c_prev = carry
        # Recurrent part only: the x @ W_ih^T + bias term was precomputed.
        gates = gx_ref[t] + jnp.dot(h_prev, whh,
                                    preferred_element_type=jnp.float32)
        act = jnp.where(is_g, jnp.tanh(gates), jax.nn.sigmoid(gates))
        i_g = act[:, 0 * H:1 * H]
        f_g = act[:, 1 * H:2 * H]
        g_g = act[:, 2 * H:3 * H]
        o_g = act[:, 3 * H:4 * H]
        c_new = f_g * c_prev + i_g * g_g
        h_new = o_g * jnp.tanh(c_new)
        return h_new, c_new

    h, c = lax.fori_loop(0, time_chunk, step, (h_sc[...], c_sc[...]),
                         unroll=True)
    h_sc[...] = h
    c_sc[...] = c

    # Final chunk: apply the (lane-padded) fully-connected head to h_T.
    @pl.when(chunk == pl.num_programs(0) - 1)
    def _():
        out_ref[...] = (jnp.dot(h, wfc_ref[...],
                                preferred_element_type=jnp.float32)
                        + bfc_ref[...]).astype(out_ref.dtype)


def _pick_time_chunk(T, max_chunk=32):
    """Largest divisor of T not exceeding max_chunk (bounds unroll size)."""
    if T <= max_chunk:
        return T
    for c in range(max_chunk, 0, -1):
        if T % c == 0:
            return c
    return 1


def protein_rnn_forward(x, params):
    """x: (B, T, input_size) float32, batch_first (matches the PyTorch module)."""
    B, T, I = x.shape
    H = params["w_hh"].shape[1]          # w_hh: (4H, H)
    O = params["fc_w"].shape[0]          # fc_w: (O, H)
    O_pad = max(_LANE, ((O + _LANE - 1) // _LANE) * _LANE)

    # Hoisted, non-recurrent input projection: one big MXU-friendly matmul,
    # produced directly in time-major layout (no separate transpose pass on x).
    bias = (params["b_ih"] + params["b_hh"]).astype(jnp.float32)
    gx = jnp.einsum("bti,gi->tbg", x.astype(jnp.float32),
                    params["w_ih"].astype(jnp.float32)) + bias     # (T, B, 4H)

    whh_t = params["w_hh"].T.astype(jnp.float32)                    # (H, 4H)

    # Lane-dense FC head: pad output dim up to 128 lanes; slice back outside.
    wfc_pad = jnp.zeros((H, O_pad), jnp.float32).at[:, :O].set(
        params["fc_w"].T.astype(jnp.float32))
    bfc_pad = jnp.zeros((1, O_pad), jnp.float32).at[:, :O].set(
        params["fc_b"].astype(jnp.float32))

    Tc = _pick_time_chunk(T)
    grid = (T // Tc,)

    kernel = functools.partial(_lstm_fc_kernel, hidden_size=H, time_chunk=Tc)

    out_pad = pl.pallas_call(
        kernel,
        out_shape=jax.ShapeDtypeStruct((B, O_pad), jnp.float32),
        grid_spec=pltpu.PrefetchScalarGridSpec(
            num_scalar_prefetch=0,
            grid=grid,
            in_specs=[
                pl.BlockSpec((Tc, B, 4 * H), lambda c: (c, 0, 0)),   # gates_x chunk
                pl.BlockSpec((H, 4 * H), lambda c: (0, 0)),          # W_hh^T
                pl.BlockSpec((H, O_pad), lambda c: (0, 0)),          # fc W^T (padded)
                pl.BlockSpec((1, O_pad), lambda c: (0, 0)),          # fc bias (padded)
            ],
            out_specs=pl.BlockSpec((B, O_pad), lambda c: (0, 0)),    # resident output
            scratch_shapes=[
                pltpu.VMEM((B, H), jnp.float32),                     # h state
                pltpu.VMEM((B, H), jnp.float32),                     # c state
            ],
        ),
        compiler_params=pltpu.CompilerParams(
            dimension_semantics=("arbitrary",),                      # time is sequential
        ),
    )(gx, whh_t, wfc_pad, bfc_pad)

    return out_pad[:, :O]


def protein_rnn_reference(x, params):
    """Pure-JAX reference matching torch.nn.LSTM (batch_first) + nn.Linear."""
    B, T, I = x.shape
    H = params["w_hh"].shape[1]
    wih_t = params["w_ih"].T
    whh_t = params["w_hh"].T
    bias = params["b_ih"] + params["b_hh"]

    def step(carry, x_t):
        h, c = carry
        gates = x_t @ wih_t + h @ whh_t + bias
        i = jax.nn.sigmoid(gates[:, 0 * H:1 * H])
        f = jax.nn.sigmoid(gates[:, 1 * H:2 * H])
        g = jnp.tanh(gates[:, 2 * H:3 * H])
        o = jax.nn.sigmoid(gates[:, 3 * H:4 * H])
        c_new = f * c + i * g
        h_new = o * jnp.tanh(c_new)
        return (h_new, c_new), None

    h0 = jnp.zeros((B, H), jnp.float32)
    c0 = jnp.zeros((B, H), jnp.float32)
    (h_T, _), _ = lax.scan(step, (h0, c0), jnp.transpose(x, (1, 0, 2)))
    return h_T @ params["fc_w"].T + params["fc_b"]


def init_params(key, input_size, hidden_size, output_size):
    """Deterministic init mimicking PyTorch's U(-1/sqrt(H), 1/sqrt(H))."""
    ks = jax.random.split(key, 6)
    bound = 1.0 / jnp.sqrt(hidden_size)
    u = lambda k, shape: jax.random.uniform(k, shape, jnp.float32, -bound, bound)
    return {
        "w_ih": u(ks[0], (4 * hidden_size, input_size)),
        "w_hh": u(ks[1], (4 * hidden_size, hidden_size)),
        "b_ih": u(ks[2], (4 * hidden_size,)),
        "b_hh": u(ks[3], (4 * hidden_size,)),
        "fc_w": u(ks[4], (output_size, hidden_size)),
        "fc_b": u(ks[5], (output_size,)),
    }


if __name__ == "__main__":
    B, T, INPUT, HIDDEN, OUTPUT = 2, 8, 16, 32, 4

    key = jax.random.PRNGKey(0)
    k_x, k_p = jax.random.split(key)
    x = jax.random.normal(k_x, (B, T, INPUT), jnp.float32)
    params = init_params(k_p, INPUT, HIDDEN, OUTPUT)

    out = protein_rnn_forward(x, params)
    out = jax.block_until_ready(out)

    ref = protein_rnn_reference(x, params)
    assert out.shape == (B, OUTPUT)
    assert jnp.allclose(out, ref, atol=1e-4, rtol=1e-4), (out, ref)

    print("KERNEL_OK")
</pallas_src>

<mosaic_0001>
module attributes {stable_mosaic.version = 11 : i64} {
  func.func @_lstm_fc_kernel(%arg0: i32, %arg1: memref<8x2x128xf32, #tpu.memory_space<vmem>>, %arg2: memref<32x128xf32, #tpu.memory_space<vmem>>, %arg3: memref<32x128xf32, #tpu.memory_space<vmem>>, %arg4: memref<1x128xf32, #tpu.memory_space<vmem>>, %arg5: memref<2x128xf32, #tpu.memory_space<vmem>>, %arg6: memref<2x32xf32, #tpu.memory_space<vmem>>, %arg7: memref<2x32xf32, #tpu.memory_space<vmem>>) attributes {dimension_semantics = [#tpu.dimension_semantics<arbitrary>], iteration_bounds = array<i64: 1>, scalar_prefetch = 0 : i64, scratch_operands = 2 : i64, tpu.core_type = #tpu.core_type<tc>, window_params = [{transform_indices = @transform_0, window_bounds = array<i64: 8, 2, 128>}, {pipeline_mode = #tpu.pipeline_mode<synchronous>, transform_indices = @transform_1, window_bounds = array<i64: 32, 128>}, {pipeline_mode = #tpu.pipeline_mode<synchronous>, transform_indices = @transform_2, window_bounds = array<i64: 32, 128>}, {pipeline_mode = #tpu.pipeline_mode<synchronous>, transform_indices = @transform_3, window_bounds = array<i64: 1, 128>}, {pipeline_mode = #tpu.pipeline_mode<synchronous>, transform_indices = @transform_4, window_bounds = array<i64: 2, 128>}]} {
    %c0_i32 = arith.constant 0 : i32
    %0 = arith.cmpi eq, %arg0, %c0_i32 : i32
    %1 = arith.extui %0 : i1 to i32
    %c0_i32_0 = arith.constant 0 : i32
    %2 = arith.cmpi ne, %1, %c0_i32_0 : i32
    scf.if %2 {
      %cst_44 = arith.constant 0.000000e+00 : f32
      %185 = vector.broadcast %cst_44 : f32 to vector<2x32xf32>
      %c0_45 = arith.constant 0 : index
      %c0_46 = arith.constant 0 : index
      %186 = vector.load %arg6[%c0_45, %c0_46] : memref<2x32xf32, #tpu.memory_space<vmem>>, vector<2x32xf32>
      tpu.vector_store %arg6[%c0_45, %c0_46], %185 {strides = array<i32>} : memref<2x32xf32, #tpu.memory_space<vmem>>, vector<2x32xf32>,
      %cst_47 = arith.constant 0.000000e+00 : f32
      %187 = vector.broadcast %cst_47 : f32 to vector<2x32xf32>
      %c0_48 = arith.constant 0 : index
      %c0_49 = arith.constant 0 : index
      %188 = vector.load %arg7[%c0_48, %c0_49] : memref<2x32xf32, #tpu.memory_space<vmem>>, vector<2x32xf32>
      tpu.vector_store %arg7[%c0_48, %c0_49], %187 {strides = array<i32>} : memref<2x32xf32, #tpu.memory_space<vmem>>, vector<2x32xf32>,
      %cst_50 = arith.constant 0.000000e+00 : f32
      %189 = vector.broadcast %cst_50 : f32 to vector<2x128xf32>
      %c0_51 = arith.constant 0 : index
      %c0_52 = arith.constant 0 : index
      %190 = vector.load %arg5[%c0_51, %c0_52] : memref<2x128xf32, #tpu.memory_space<vmem>>, vector<2x128xf32>
      tpu.vector_store %arg5[%c0_51, %c0_52], %189 {strides = array<i32>} : memref<2x128xf32, #tpu.memory_space<vmem>>, vector<2x128xf32>,
    } else {
    }
    %c0 = arith.constant 0 : index
    %c0_1 = arith.constant 0 : index
    %3 = vector.load %arg2[%c0, %c0_1] : memref<32x128xf32, #tpu.memory_space<vmem>>, vector<32x128xf32>
    %4 = tpu.iota {dimensions = array<i32: 1>} : vector<2x128xi32>
    %c64_i32 = arith.constant 64 : i32
    %5 = vector.broadcast %c64_i32 : i32 to vector<2x128xi32>
    %6 = arith.cmpi sge, %4, %5 : vector<2x128xi32>
    %c96_i32 = arith.constant 96 : i32
    %7 = vector.broadcast %c96_i32 : i32 to vector<2x128xi32>
    %8 = arith.cmpi slt, %4, %7 : vector<2x128xi32>
    %9 = arith.andi %6, %8 : vector<2x128xi1>
    %c0_2 = arith.constant 0 : index
    %c0_3 = arith.constant 0 : index
    %10 = vector.load %arg6[%c0_2, %c0_3] : memref<2x32xf32, #tpu.memory_space<vmem>>, vector<2x32xf32>
    %c0_4 = arith.constant 0 : index
    %c0_5 = arith.constant 0 : index
    %11 = vector.load %arg7[%c0_4, %c0_5] : memref<2x32xf32, #tpu.memory_space<vmem>>, vector<2x32xf32>
    %c0_i32_6 = arith.constant 0 : i32
    %12 = arith.index_cast %c0_i32_6 : i32 to index
    %c0_7 = arith.constant 0 : index
    %c0_8 = arith.constant 0 : index
    %13 = vector.load %arg1[%12, %c0_7, %c0_8] : memref<8x2x128xf32, #tpu.memory_space<vmem>>, vector<1x2x128xf32>
    %14 = vector.shape_cast %13 : vector<1x2x128xf32> to vector<2x128xf32>
    %cst = arith.constant dense<0.000000e+00> : vector<2x128xf32>
    %15 = tpu.matmul %10, %3, %cst {dimension_numbers = #tpu.dot_dimension_numbers<[1], [0], [0], [1], [0, 0, 1, 1], [], []>} : vector<2x32xf32>, vector<32x128xf32>, vector<2x128xf32> -> vector<2x128xf32>
    %16 = arith.addf %14, %15 : vector<2x128xf32>
    %17 = math.tanh %16 : vector<2x128xf32>
    %18 = arith.negf %16 : vector<2x128xf32>
    %19 = math.exp %18 : vector<2x128xf32>
    %cst_9 = arith.constant 1.000000e+00 : f32
    %20 = vector.broadcast %cst_9 : f32 to vector<2x128xf32>
    %21 = arith.addf %20, %19 : vector<2x128xf32>
    %22 = arith.divf %20, %21 : vector<2x128xf32>
    %23 = arith.select %9, %17, %22 : vector<2x128xi1>, vector<2x128xf32>
    %24 = vector.extract_strided_slice %23 {offsets = [0, 0], sizes = [2, 32], strides = [1, 1]} : vector<2x128xf32> to vector<2x32xf32>
    %25 = vector.extract_strided_slice %23 {offsets = [0, 32], sizes = [2, 32], strides = [1, 1]} : vector<2x128xf32> to vector<2x32xf32>
    %26 = vector.extract_strided_slice %23 {offsets = [0, 64], sizes = [2, 32], strides = [1, 1]} : vector<2x128xf32> to vector<2x32xf32>
    %27 = vector.extract_strided_slice %23 {offsets = [0, 96], sizes = [2, 32], strides = [1, 1]} : vector<2x128xf32> to vector<2x32xf32>
    %28 = arith.mulf %25, %11 : vector<2x32xf32>
    %29 = arith.mulf %24, %26 : vector<2x32xf32>
    %30 = arith.addf %28, %29 : vector<2x32xf32>
    %31 = math.tanh %30 : vector<2x32xf32>
    %32 = arith.mulf %27, %31 : vector<2x32xf32>
    %c1_i32 = arith.constant 1 : i32
    %33 = arith.index_cast %c1_i32 : i32 to index
    %c0_10 = arith.constant 0 : index
    %c0_11 = arith.constant 0 : index
    %34 = vector.load %arg1[%33, %c0_10, %c0_11] : memref<8x2x128xf32, #tpu.memory_space<vmem>>, vector<1x2x128xf32>
    %35 = vector.shape_cast %34 : vector<1x2x128xf32> to vector<2x128xf32>
    %cst_12 = arith.constant dense<0.000000e+00> : vector<2x128xf32>
    %36 = tpu.matmul %32, %3, %cst_12 {dimension_numbers = #tpu.dot_dimension_numbers<[1], [0], [0], [1], [0, 0, 1, 1], [], []>} : vector<2x32xf32>, vector<32x128xf32>, vector<2x128xf32> -> vector<2x128xf32>
    %37 = arith.addf %35, %36 : vector<2x128xf32>
    %38 = math.tanh %37 : vector<2x128xf32>
    %39 = arith.negf %37 : vector<2x128xf32>
    %40 = math.exp %39 : vector<2x128xf32>
    %cst_13 = arith.constant 1.000000e+00 : f32
    %41 = vector.broadcast %cst_13 : f32 to vector<2x128xf32>
    %42 = arith.addf %41, %40 : vector<2x128xf32>
    %43 = arith.divf %41, %42 : vector<2x128xf32>
    %44 = arith.select %9, %38, %43 : vector<2x128xi1>, vector<2x128xf32>
    %45 = vector.extract_strided_slice %44 {offsets = [0, 0], sizes = [2, 32], strides = [1, 1]} : vector<2x128xf32> to vector<2x32xf32>
    %46 = vector.extract_strided_slice %44 {offsets = [0, 32], sizes = [2, 32], strides = [1, 1]} : vector<2x128xf32> to vector<2x32xf32>
    %47 = vector.extract_strided_slice %44 {offsets = [0, 64], sizes = [2, 32], strides = [1, 1]} : vector<2x128xf32> to vector<2x32xf32>
    %48 = vector.extract_strided_slice %44 {offsets = [0, 96], sizes = [2, 32], strides = [1, 1]} : vector<2x128xf32> to vector<2x32xf32>
    %49 = arith.mulf %46, %30 : vector<2x32xf32>
    %50 = arith.mulf %45, %47 : vector<2x32xf32>
    %51 = arith.addf %49, %50 : vector<2x32xf32>
    %52 = math.tanh %51 : vector<2x32xf32>
    %53 = arith.mulf %48, %52 : vector<2x32xf32>
    %c2_i32 = arith.constant 2 : i32
    %54 = arith.index_cast %c2_i32 : i32 to index
    %c0_14 = arith.constant 0 : index
    %c0_15 = arith.constant 0 : index
    %55 = vector.load %arg1[%54, %c0_14, %c0_15] : memref<8x2x128xf32, #tpu.memory_space<vmem>>, vector<1x2x128xf32>
    %56 = vector.shape_cast %55 : vector<1x2x128xf32> to vector<2x128xf32>
    %cst_16 = arith.constant dense<0.000000e+00> : vector<2x128xf32>
    %57 = tpu.matmul %53, %3, %cst_16 {dimension_numbers = #tpu.dot_dimension_numbers<[1], [0], [0], [1], [0, 0, 1, 1], [], []>} : vector<2x32xf32>, vector<32x128xf32>, vector<2x128xf32> -> vector<2x128xf32>
    %58 = arith.addf %56, %57 : vector<2x128xf32>
    %59 = math.tanh %58 : vector<2x128xf32>
    %60 = arith.negf %58 : vector<2x128xf32>
    %61 = math.exp %60 : vector<2x128xf32>
    %cst_17 = arith.constant 1.000000e+00 : f32
    %62 = vector.broadcast %cst_17 : f32 to vector<2x128xf32>
    %63 = arith.addf %62, %61 : vector<2x128xf32>
    %64 = arith.divf %62, %63 : vector<2x128xf32>
    %65 = arith.select %9, %59, %64 : vector<2x128xi1>, vector<2x128xf32>
    %66 = vector.extract_strided_slice %65 {offsets = [0, 0], sizes = [2, 32], strides = [1, 1]} : vector<2x128xf32> to vector<2x32xf32>
    %67 = vector.extract_strided_slice %65 {offsets = [0, 32], sizes = [2, 32], strides = [1, 1]} : vector<2x128xf32> to vector<2x32xf32>
    %68 = vector.extract_strided_slice %65 {offsets = [0, 64], sizes = [2, 32], strides = [1, 1]} : vector<2x128xf32> to vector<2x32xf32>
    %69 = vector.extract_strided_slice %65 {offsets = [0, 96], sizes = [2, 32], strides = [1, 1]} : vector<2x128xf32> to vector<2x32xf32>
    %70 = arith.mulf %67, %51 : vector<2x32xf32>
    %71 = arith.mulf %66, %68 : vector<2x32xf32>
    %72 = arith.addf %70, %71 : vector<2x32xf32>
    %73 = math.tanh %72 : vector<2x32xf32>
    %74 = arith.mulf %69, %73 : vector<2x32xf32>
    %c3_i32 = arith.constant 3 : i32
    %75 = arith.index_cast %c3_i32 : i32 to index
    %c0_18 = arith.constant 0 : index
    %c0_19 = arith.constant 0 : index
    %76 = vector.load %arg1[%75, %c0_18, %c0_19] : memref<8x2x128xf32, #tpu.memory_space<vmem>>, vector<1x2x128xf32>
    %77 = vector.shape_cast %76 : vector<1x2x128xf32> to vector<2x128xf32>
    %cst_20 = arith.constant dense<0.000000e+00> : vector<2x128xf32>
    %78 = tpu.matmul %74, %3, %cst_20 {dimension_numbers = #tpu.dot_dimension_numbers<[1], [0], [0], [1], [0, 0, 1, 1], [], []>} : vector<2x32xf32>, vector<32x128xf32>, vector<2x128xf32> -> vector<2x128xf32>
    %79 = arith.addf %77, %78 : vector<2x128xf32>
    %80 = math.tanh %79 : vector<2x128xf32>
    %81 = arith.negf %79 : vector<2x128xf32>
    %82 = math.exp %81 : vector<2x128xf32>
    %cst_21 = arith.constant 1.000000e+00 : f32
    %83 = vector.broadcast %cst_21 : f32 to vector<2x128xf32>
    %84 = arith.addf %83, %82 : vector<2x128xf32>
    %85 = arith.divf %83, %84 : vector<2x128xf32>
    %86 = arith.select %9, %80, %85 : vector<2x128xi1>, vector<2x128xf32>
    %87 = vector.extract_strided_slice %86 {offsets = [0, 0], sizes = [2, 32], strides = [1, 1]} : vector<2x128xf32> to vector<2x32xf32>
    %88 = vector.extract_strided_slice %86 {offsets = [0, 32], sizes = [2, 32], strides = [1, 1]} : vector<2x128xf32> to vector<2x32xf32>
    %89 = vector.extract_strided_slice %86 {offsets = [0, 64], sizes = [2, 32], strides = [1, 1]} : vector<2x128xf32> to vector<2x32xf32>
    %90 = vector.extract_strided_slice %86 {offsets = [0, 96], sizes = [2, 32], strides = [1, 1]} : vector<2x128xf32> to vector<2x32xf32>
    %91 = arith.mulf %88, %72 : vector<2x32xf32>
    %92 = arith.mulf %87, %89 : vector<2x32xf32>
    %93 = arith.addf %91, %92 : vector<2x32xf32>
    %94 = math.tanh %93 : vector<2x32xf32>
    %95 = arith.mulf %90, %94 : vector<2x32xf32>
    %c4_i32 = arith.constant 4 : i32
    %96 = arith.index_cast %c4_i32 : i32 to index
    %c0_22 = arith.constant 0 : index
    %c0_23 = arith.constant 0 : index
    %97 = vector.load %arg1[%96, %c0_22, %c0_23] : memref<8x2x128xf32, #tpu.memory_space<vmem>>, vector<1x2x128xf32>
    %98 = vector.shape_cast %97 : vector<1x2x128xf32> to vector<2x128xf32>
    %cst_24 = arith.constant dense<0.000000e+00> : vector<2x128xf32>
    %99 = tpu.matmul %95, %3, %cst_24 {dimension_numbers = #tpu.dot_dimension_numbers<[1], [0], [0], [1], [0, 0, 1, 1], [], []>} : vector<2x32xf32>, vector<32x128xf32>, vector<2x128xf32> -> vector<2x128xf32>
    %100 = arith.addf %98, %99 : vector<2x128xf32>
    %101 = math.tanh %100 : vector<2x128xf32>
    %102 = arith.negf %100 : vector<2x128xf32>
    %103 = math.exp %102 : vector<2x128xf32>
    %cst_25 = arith.constant 1.000000e+00 : f32
    %104 = vector.broadcast %cst_25 : f32 to vector<2x128xf32>
    %105 = arith.addf %104, %103 : vector<2x128xf32>
    %106 = arith.divf %104, %105 : vector<2x128xf32>
    %107 = arith.select %9, %101, %106 : vector<2x128xi1>, vector<2x128xf32>
    %108 = vector.extract_strided_slice %107 {offsets = [0, 0], sizes = [2, 32], strides = [1, 1]} : vector<2x128xf32> to vector<2x32xf32>
    %109 = vector.extract_strided_slice %107 {offsets = [0, 32], sizes = [2, 32], strides = [1, 1]} : vector<2x128xf32> to vector<2x32xf32>
    %110 = vector.extract_strided_slice %107 {offsets = [0, 64], sizes = [2, 32], strides = [1, 1]} : vector<2x128xf32> to vector<2x32xf32>
    %111 = vector.extract_strided_slice %107 {offsets = [0, 96], sizes = [2, 32], strides = [1, 1]} : vector<2x128xf32> to vector<2x32xf32>
    %112 = arith.mulf %109, %93 : vector<2x32xf32>
    %113 = arith.mulf %108, %110 : vector<2x32xf32>
    %114 = arith.addf %112, %113 : vector<2x32xf32>
    %115 = math.tanh %114 : vector<2x32xf32>
    %116 = arith.mulf %111, %115 : vector<2x32xf32>
    %c5_i32 = arith.constant 5 : i32
    %117 = arith.index_cast %c5_i32 : i32 to index
    %c0_26 = arith.constant 0 : index
    %c0_27 = arith.constant 0 : index
    %118 = vector.load %arg1[%117, %c0_26, %c0_27] : memref<8x2x128xf32, #tpu.memory_space<vmem>>, vector<1x2x128xf32>
    %119 = vector.shape_cast %118 : vector<1x2x128xf32> to vector<2x128xf32>
    %cst_28 = arith.constant dense<0.000000e+00> : vector<2x128xf32>
    %120 = tpu.matmul %116, %3, %cst_28 {dimension_numbers = #tpu.dot_dimension_numbers<[1], [0], [0], [1], [0, 0, 1, 1], [], []>} : vector<2x32xf32>, vector<32x128xf32>, vector<2x128xf32> -> vector<2x128xf32>
    %121 = arith.addf %119, %120 : vector<2x128xf32>
    %122 = math.tanh %121 : vector<2x128xf32>
    %123 = arith.negf %121 : vector<2x128xf32>
    %124 = math.exp %123 : vector<2x128xf32>
    %cst_29 = arith.constant 1.000000e+00 : f32
    %125 = vector.broadcast %cst_29 : f32 to vector<2x128xf32>
    %126 = arith.addf %125, %124 : vector<2x128xf32>
    %127 = arith.divf %125, %126 : vector<2x128xf32>
    %128 = arith.select %9, %122, %127 : vector<2x128xi1>, vector<2x128xf32>
    %129 = vector.extract_strided_slice %128 {offsets = [0, 0], sizes = [2, 32], strides = [1, 1]} : vector<2x128xf32> to vector<2x32xf32>
    %130 = vector.extract_strided_slice %128 {offsets = [0, 32], sizes = [2, 32], strides = [1, 1]} : vector<2x128xf32> to vector<2x32xf32>
    %131 = vector.extract_strided_slice %128 {offsets = [0, 64], sizes = [2, 32], strides = [1, 1]} : vector<2x128xf32> to vector<2x32xf32>
    %132 = vector.extract_strided_slice %128 {offsets = [0, 96], sizes = [2, 32], strides = [1, 1]} : vector<2x128xf32> to vector<2x32xf32>
    %133 = arith.mulf %130, %114 : vector<2x32xf32>
    %134 = arith.mulf %129, %131 : vector<2x32xf32>
    %135 = arith.addf %133, %134 : vector<2x32xf32>
    %136 = math.tanh %135 : vector<2x32xf32>
    %137 = arith.mulf %132, %136 : vector<2x32xf32>
    %c6_i32 = arith.constant 6 : i32
    %138 = arith.index_cast %c6_i32 : i32 to index
    %c0_30 = arith.constant 0 : index
    %c0_31 = arith.constant 0 : index
    %139 = vector.load %arg1[%138, %c0_30, %c0_31] : memref<8x2x128xf32, #tpu.memory_space<vmem>>, vector<1x2x128xf32>
    %140 = vector.shape_cast %139 : vector<1x2x128xf32> to vector<2x128xf32>
    %cst_32 = arith.constant dense<0.000000e+00> : vector<2x128xf32>
    %141 = tpu.matmul %137, %3, %cst_32 {dimension_numbers = #tpu.dot_dimension_numbers<[1], [0], [0], [1], [0, 0, 1, 1], [], []>} : vector<2x32xf32>, vector<32x128xf32>, vector<2x128xf32> -> vector<2x128xf32>
    %142 = arith.addf %140, %141 : vector<2x128xf32>
    %143 = math.tanh %142 : vector<2x128xf32>
    %144 = arith.negf %142 : vector<2x128xf32>
    %145 = math.exp %144 : vector<2x128xf32>
    %cst_33 = arith.constant 1.000000e+00 : f32
    %146 = vector.broadcast %cst_33 : f32 to vector<2x128xf32>
    %147 = arith.addf %146, %145 : vector<2x128xf32>
    %148 = arith.divf %146, %147 : vector<2x128xf32>
    %149 = arith.select %9, %143, %148 : vector<2x128xi1>, vector<2x128xf32>
    %150 = vector.extract_strided_slice %149 {offsets = [0, 0], sizes = [2, 32], strides = [1, 1]} : vector<2x128xf32> to vector<2x32xf32>
    %151 = vector.extract_strided_slice %149 {offsets = [0, 32], sizes = [2, 32], strides = [1, 1]} : vector<2x128xf32> to vector<2x32xf32>
    %152 = vector.extract_strided_slice %149 {offsets = [0, 64], sizes = [2, 32], strides = [1, 1]} : vector<2x128xf32> to vector<2x32xf32>
    %153 = vector.extract_strided_slice %149 {offsets = [0, 96], sizes = [2, 32], strides = [1, 1]} : vector<2x128xf32> to vector<2x32xf32>
    %154 = arith.mulf %151, %135 : vector<2x32xf32>
    %155 = arith.mulf %150, %152 : vector<2x32xf32>
    %156 = arith.addf %154, %155 : vector<2x32xf32>
    %157 = math.tanh %156 : vector<2x32xf32>
    %158 = arith.mulf %153, %157 : vector<2x32xf32>
    %c7_i32 = arith.constant 7 : i32
    %159 = arith.index_cast %c7_i32 : i32 to index
    %c0_34 = arith.constant 0 : index
    %c0_35 = arith.constant 0 : index
    %160 = vector.load %arg1[%159, %c0_34, %c0_35] : memref<8x2x128xf32, #tpu.memory_space<vmem>>, vector<1x2x128xf32>
    %161 = vector.shape_cast %160 : vector<1x2x128xf32> to vector<2x128xf32>
    %cst_36 = arith.constant dense<0.000000e+00> : vector<2x128xf32>
    %162 = tpu.matmul %158, %3, %cst_36 {dimension_numbers = #tpu.dot_dimension_numbers<[1], [0], [0], [1], [0, 0, 1, 1], [], []>} : vector<2x32xf32>, vector<32x128xf32>, vector<2x128xf32> -> vector<2x128xf32>
    %163 = arith.addf %161, %162 : vector<2x128xf32>
    %164 = math.tanh %163 : vector<2x128xf32>
    %165 = arith.negf %163 : vector<2x128xf32>
    %166 = math.exp %165 : vector<2x128xf32>
    %cst_37 = arith.constant 1.000000e+00 : f32
    %167 = vector.broadcast %cst_37 : f32 to vector<2x128xf32>
    %168 = arith.addf %167, %166 : vector<2x128xf32>
    %169 = arith.divf %167, %168 : vector<2x128xf32>
    %170 = arith.select %9, %164, %169 : vector<2x128xi1>, vector<2x128xf32>
    %171 = vector.extract_strided_slice %170 {offsets = [0, 0], sizes = [2, 32], strides = [1, 1]} : vector<2x128xf32> to vector<2x32xf32>
    %172 = vector.extract_strided_slice %170 {offsets = [0, 32], sizes = [2, 32], strides = [1, 1]} : vector<2x128xf32> to vector<2x32xf32>
    %173 = vector.extract_strided_slice %170 {offsets = [0, 64], sizes = [2, 32], strides = [1, 1]} : vector<2x128xf32> to vector<2x32xf32>
    %174 = vector.extract_strided_slice %170 {offsets = [0, 96], sizes = [2, 32], strides = [1, 1]} : vector<2x128xf32> to vector<2x32xf32>
    %175 = arith.mulf %172, %156 : vector<2x32xf32>
    %176 = arith.mulf %171, %173 : vector<2x32xf32>
    %177 = arith.addf %175, %176 : vector<2x32xf32>
    %178 = math.tanh %177 : vector<2x32xf32>
    %179 = arith.mulf %174, %178 : vector<2x32xf32>
    %c8_i32 = arith.constant 8 : i32
    %c0_38 = arith.constant 0 : index
    %c0_39 = arith.constant 0 : index
    %180 = vector.load %arg6[%c0_38, %c0_39] : memref<2x32xf32, #tpu.memory_space<vmem>>, vector<2x32xf32>
    tpu.vector_store %arg6[%c0_38, %c0_39], %179 {strides = array<i32>} : memref<2x32xf32, #tpu.memory_space<vmem>>, vector<2x32xf32>,
    %c0_40 = arith.constant 0 : index
    %c0_41 = arith.constant 0 : index
    %181 = vector.load %arg7[%c0_40, %c0_41] : memref<2x32xf32, #tpu.memory_space<vmem>>, vector<2x32xf32>
    tpu.vector_store %arg7[%c0_40, %c0_41], %177 {strides = array<i32>} : memref<2x32xf32, #tpu.memory_space<vmem>>, vector<2x32xf32>,
    %c0_i32_42 = arith.constant 0 : i32
    %182 = arith.cmpi eq, %arg0, %c0_i32_42 : i32
    %183 = arith.extui %182 : i1 to i32
    %c0_i32_43 = arith.constant 0 : i32
    %184 = arith.cmpi ne, %183, %c0_i32_43 : i32
    scf.if %184 {
      %c0_44 = arith.constant 0 : index
      %c0_45 = arith.constant 0 : index
      %185 = vector.load %arg3[%c0_44, %c0_45] : memref<32x128xf32, #tpu.memory_space<vmem>>, vector<32x128xf32>
      %cst_46 = arith.constant dense<0.000000e+00> : vector<2x128xf32>
      %186 = tpu.matmul %179, %185, %cst_46 {dimension_numbers = #tpu.dot_dimension_numbers<[1], [0], [0], [1], [0, 0, 1, 1], [], []>} : vector<2x32xf32>, vector<32x128xf32>, vector<2x128xf32> -> vector<2x128xf32>
      %c0_47 = arith.constant 0 : index
      %c0_48 = arith.constant 0 : index
      %187 = vector.load %arg4[%c0_47, %c0_48] : memref<1x128xf32, #tpu.memory_space<vmem>>, vector<1x128xf32>
      %188 = vector.broadcast %187 : vector<1x128xf32> to vector<2x128xf32>
      %189 = arith.addf %186, %188 : vector<2x128xf32>
      %c0_49 = arith.constant 0 : index
      %c0_50 = arith.constant 0 : index
      %190 = vector.load %arg5[%c0_49, %c0_50] : memref<2x128xf32, #tpu.memory_space<vmem>>, vector<2x128xf32>
      tpu.vector_store %arg5[%c0_49, %c0_50], %189 {strides = array<i32>} : memref<2x128xf32, #tpu.memory_space<vmem>>, vector<2x128xf32>,
    } else {
    }
    return
  }
  func.func @transform_0(%arg0: i32) -> (i32, i32, i32) {
    %c0_i32 = arith.constant 0 : i32
    %c0_i32_0 = arith.constant 0 : i32
    %c0_i32_1 = arith.constant 0 : i32
    return %arg0, %c0_i32, %c0_i32_0 : i32, i32, i32
  }
  func.func @transform_1(%arg0: i32) -> (i32, i32) {
    %c0_i32 = arith.constant 0 : i32
    %c0_i32_0 = arith.constant 0 : i32
    %c0_i32_1 = arith.constant 0 : i32
    return %c0_i32, %c0_i32_0 : i32, i32
  }
  func.func @transform_2(%arg0: i32) -> (i32, i32) {
    %c0_i32 = arith.constant 0 : i32
    %c0_i32_0 = arith.constant 0 : i32
    %c0_i32_1 = arith.constant 0 : i32
    return %c0_i32, %c0_i32_0 : i32, i32
  }
  func.func @transform_3(%arg0: i32) -> (i32, i32) {
    %c0_i32 = arith.constant 0 : i32
    %c0_i32_0 = arith.constant 0 : i32
    %c0_i32_1 = arith.constant 0 : i32
    return %c0_i32, %c0_i32_0 : i32, i32
  }
  func.func @transform_4(%arg0: i32) -> (i32, i32) {
    %c0_i32 = arith.constant 0 : i32
    %c0_i32_0 = arith.constant 0 : i32
    %c0_i32_1 = arith.constant 0 : i32
    return %c0_i32, %c0_i32_0 : i32, i32
  }
}

</mosaic_0001>

<llo_original>
// kernel: tpu_custom_call.1
$region0: #{tpu_custom_call.1}
  #allocation0 [shape = 'u32[]', space=smem, size = 0x4, offset = 0x4, fixed_abs, tag = 'smem constant byte address 0x4 - core index']
  #allocation1 [shape = 'u32[144,128]{1,0:T(1,128)}', space=vmem, size = 0x12000, scoped, tag = 'internal scratch']
  #allocation2 [shape = 'f32[2,32]{1,0:T(2,128)}', space=vmem, size = 0x400, scoped, tag = 'scratch operand']
  #allocation3 [shape = 'f32[2,32]{1,0:T(2,128)}', space=vmem, size = 0x400, scoped, tag = 'scratch operand']
  %s0 = inlined_call_operand.hbm [shape: f32[8,2,128], index: 0, kind: input, shape index: {}]
  %s1 = inlined_call_operand.hbm [shape: f32[32,128], index: 1, kind: input, shape index: {}]
  %s2 = inlined_call_operand.hbm [shape: f32[32,128], index: 2, kind: input, shape index: {}]
  %s3 = inlined_call_operand.vmem [shape: f32[1,128], index: 3, kind: input, shape index: {}]
  %s4 = inlined_call_operand.hbm [shape: f32[2,128], index: 4, kind: output, shape index: {}]
  %s5 = sld [smem:[#allocation0]]
  $region46: #{tpu_custom_call.1} parent=0
    _
  %s7 = ssub.s32 1, %s5
  %s8 = scalar_select 0, %s7, %s5
  $region1: #{tpu_custom_call.1} parent=0
    #allocation4 [shape = 'u8[8192]{0}', space=vmem, size = 0x2000, scoped, tag = 'input window, operand 0, single buffered']
    #allocation5 [shape = 's32[1]{0}', space=sflag, size = 0x4, scoped, tag = 'scoped memory for tpu_custom_call.1']
    #allocation6 [shape = 's32[1]{0}', space=sflag, size = 0x4, scoped, tag = 'scoped memory for tpu_custom_call.1']
    #allocation7 [shape = 'u8[16384]{0}', space=vmem, size = 0x4000, scoped, tag = 'input window, operand 1, single buffered']
    #allocation8 [shape = 's32[1]{0}', space=sflag, size = 0x4, scoped, tag = 'scoped memory for tpu_custom_call.1']
    #allocation9 [shape = 'u8[16384]{0}', space=vmem, size = 0x4000, scoped, tag = 'input window, operand 2, single buffered']
    #allocation10 [shape = 'u8[1024]{0}', space=vmem, size = 0x400, scoped, tag = 'output window, operand 0, single buffered']
    %9 = vsyncpa [#allocation5], 0
    %10 = vsyncpa [#allocation8], 0
    %11 = vsyncpa [#allocation6], 0
    // Predicated region
    $region2: #{tpu_custom_call.1} parent=1 // pred_check
      _
    $region3: #{tpu_custom_call.1} parent=1 // pred_check_branch
      %13 = sbr.rel (0) target = $region5
    $region4: #{tpu_custom_call.1} parent=1 // pred_region
      %s15 = ssub.s32 256, 256
      %16 = vsyncadd [#allocation5], %s15
      %s17 = sshll.u32 [#allocation4], 4
      %s18 = int_to_ptr.vmem [resolvable:$true] %s17
      %23 = dma.hbm_to_vmem [thread:$0]  %s0, 256, %s18, [#allocation5], 32, 32, 2
    $region5: #{tpu_custom_call.1} parent=1 // pred_fallthru
      _
    // Predicated region
    $region6: #{tpu_custom_call.1} parent=1 // pred_check
      _
    $region7: #{tpu_custom_call.1} parent=1 // pred_check_branch
      %25 = sbr.rel (0) target = $region9
    $region8: #{tpu_custom_call.1} parent=1 // pred_region
      %s27 = ssub.s32 512, 512
      %28 = vsyncadd [#allocation8], %s27
      %s29 = sshll.u32 [#allocation7], 4
      %s30 = int_to_ptr.vmem [resolvable:$true] %s29
      %35 = dma.hbm_to_vmem [thread:$0]  %s1, 512, %s30, [#allocation8], 128, 128, 8
    $region9: #{tpu_custom_call.1} parent=1 // pred_fallthru
      _
    // Predicated region
    $region10: #{tpu_custom_call.1} parent=1 // pred_check
      _
    $region11: #{tpu_custom_call.1} parent=1 // pred_check_branch
      %37 = sbr.rel (0) target = $region13
    $region12: #{tpu_custom_call.1} parent=1 // pred_region
      %s39 = ssub.s32 512, 512
      %40 = vsyncadd [#allocation8], %s39
      %s41 = sshll.u32 [#allocation9], 4
      %s42 = int_to_ptr.vmem [resolvable:$true] %s41
      %47 = dma.hbm_to_vmem [thread:$0]  %s2, 512, %s42, [#allocation8], 128, 128, 8
    $region13: #{tpu_custom_call.1} parent=1 // pred_fallthru
      _
    // Predicated region
    $region14: #{tpu_custom_call.1} parent=1 // pred_check
      _
    $region15: #{tpu_custom_call.1} parent=1 // pred_check_branch
      %49 = sbr.rel (0) target = $region17
    $region16: #{tpu_custom_call.1} parent=1 // pred_region
      _
    $region17: #{tpu_custom_call.1} parent=1 // pred_fallthru
      _
    // Predicated region
    $region18: #{tpu_custom_call.1} parent=1 // pred_check
      _
    $region19: #{tpu_custom_call.1} parent=1 // pred_check_branch
      %51 = sbr.rel (0) target = $region21
    $region20: #{tpu_custom_call.1} parent=1 // pred_region
      %52 = dma.done [#allocation5], 256
    $region21: #{tpu_custom_call.1} parent=1 // pred_fallthru
      _
    // Predicated region
    $region22: #{tpu_custom_call.1} parent=1 // pred_check
      _
    $region23: #{tpu_custom_call.1} parent=1 // pred_check_branch
      %54 = sbr.rel (0) target = $region25
    $region24: #{tpu_custom_call.1} parent=1 // pred_region
      %55 = dma.done [#allocation8], 512
    $region25: #{tpu_custom_call.1} parent=1 // pred_fallthru
      _
    // Predicated region
    $region26: #{tpu_custom_call.1} parent=1 // pred_check
      _
    $region27: #{tpu_custom_call.1} parent=1 // pred_check_branch
      %57 = sbr.rel (0) target = $region29
    $region28: #{tpu_custom_call.1} parent=1 // pred_region
      %58 = dma.done [#allocation8], 512
    $region29: #{tpu_custom_call.1} parent=1 // pred_fallthru
      _
    %p59 = scmp.eq.s32.totalorder 0, 0
    // Predicated region
    $region30: #{tpu_custom_call.1} parent=1 // pred_check
      %p60 = pneg %p59
    $region31: #{tpu_custom_call.1} parent=1 // pred_check_branch
      %62 = sbr.rel (%p60) target = $region33
    $region32: #{tpu_custom_call.1} parent=1 // pred_region
      %vm63 = vcmask 254976
      %64 = vst.msk [vmem:[#allocation2] sm:$0x3] %vm63, 0.0
      %65 = vst.msk [vmem:[#allocation3] sm:$0x3] %vm63, 0.0
      %66 = vst [vmem:[#allocation10] sm:$0x3] 0.0
    $region33: #{tpu_custom_call.1} parent=1 // pred_fallthru
      _
    %v67 = vld [vmem:[#allocation7] sm:$0xff]
    %v68 = vld [vmem:[#allocation7 + $0x8] sm:$0xff]
    %v69 = vld [vmem:[#allocation7 + $0x10] sm:$0xff]
    %v70 = vld [vmem:[#allocation7 + $0x18] sm:$0xff]
    %v71 = vlaneseq
    %v72 = vand.u32 %v71, 127
    %vm73 = vcmp.ge.s32.totalorder %v72, 64
    %vm74 = vcmp.lt.s32.totalorder %v72, 96
    %vm75 = vmand %vm73, %vm74
    %v76 = vld [vmem:[#allocation2] sm:$0x3]
    %v77 = vld [vmem:[#allocation3] sm:$0x3]
    %v78 = vld [vmem:[#allocation4] sm:$0x3]
    %vm79 = vcmask 261120
    %v81 = vsel %vm79, %v76, 0
    %83 = vmatprep.subr.mxu0 0.0
    %84 = vmatpush1.msra.mxu0 %v67
    %85 = vmatprep.subr.mxu0 0.0
    %86 = vmatpush1.msra.mxu0 %v68
    %87 = vmatprep.subr.mxu0 0.0
    %88 = vmatpush1.msra.mxu0 %v69
    %89 = vmatprep.subr.mxu0 0.0
    %90 = vmatpush1.msra.mxu0 %v70
    %91 = vmatprep.subr.mxu0 0.0
    %92 = vmatpush1.msra.mxu0 0.0
    %93 = vmatprep.subr.mxu0 0.0
    %94 = vmatpush1.msra.mxu0 0.0
    %95 = vmatprep.subr.mxu0 0.0
    %96 = vmatpush1.msra.mxu0 0.0
    %97 = vmatprep.subr.mxu0 0.0
    %98 = vmatpush1.msra.mxu0 0.0
    %99 = vmatprep.subr.mxu0 0.0
    %100 = vmatpush1.msra.mxu0 0.0
    %101 = vmatprep.subr.mxu0 0.0
    %102 = vmatpush1.msra.mxu0 0.0
    %103 = vmatprep.subr.mxu0 0.0
    %104 = vmatpush1.msra.mxu0 0.0
    %105 = vmatprep.subr.mxu0 0.0
    %106 = vmatpush1.msra.mxu0 0.0
    %107 = vmatprep.subr.mxu0 0.0
    %108 = vmatpush1.msra.mxu0 0.0
    %109 = vmatprep.subr.mxu0 0.0
    %110 = vmatpush1.msra.mxu0 0.0
    %111 = vmatprep.subr.mxu0 0.0
    %112 = vmatpush1.msra.mxu0 0.0
    %113 = vmatprep.subr.mxu0 0.0
    %114 = vmatpush1.msra.mxu0 0.0
    %115 = vmatprep.subr.mxu0 0.0
    %116 = vmatpush1.msra.mxu0 0.0
    %117 = vmatprep.subr.mxu0 0.0
    %118 = vmatpush1.msra.mxu0 0.0
    %119 = vmatprep.subr.mxu0 0.0
    %120 = vmatpush1.msra.mxu0 0.0
    %121 = vmatprep.subr.mxu0 0.0
    %122 = vmatpush1.msra.mxu0 0.0
    %123 = vmatprep.subr.mxu0 0.0
    %124 = vmatpush1.msra.mxu0 0.0
    %125 = vmatprep.subr.mxu0 0.0
    %126 = vmatpush1.msra.mxu0 0.0
    %127 = vmatprep.subr.mxu0 0.0
    %128 = vmatpush1.msra.mxu0 0.0
    %129 = vmatprep.subr.mxu0 0.0
    %130 = vmatpush1.msra.mxu0 0.0
    %131 = vmatprep.subr.mxu0 0.0
    %132 = vmatpush1.msra.mxu0 0.0
    %133 = vmatprep.subr.mxu0 0.0
    %134 = vmatpush1.msra.mxu0 0.0
    %135 = vmatprep.subr.mxu0 0.0
    %136 = vmatpush1.msra.mxu0 0.0
    %137 = vmatprep.subr.mxu0 0.0
    %138 = vmatpush1.msra.mxu0 0.0
    %139 = vmatprep.subr.mxu0 0.0
    %140 = vmatpush1.msra.mxu0 0.0
    %141 = vmatprep.subr.mxu0 0.0
    %142 = vmatpush1.msra.mxu0 0.0
    %143 = vmatprep.subr.mxu0 0.0
    %144 = vmatpush1.msra.mxu0 0.0
    %145 = vmatprep.subr.mxu0 0.0
    %146 = vmatpush1.msra.mxu0 0.0
    %147 = vmatprep.mubr.f32.mxu0 0.0
    %148 = vmatmul.mubr.f32.gmra.mrb[0].mxu0 %v81
    %v149 = vpop.f32.mrb[0].mxu0
    %v150 = vadd.f32 0.0, %v149
    %v151 = vpop.f32.mrb[0].mxu0
    %152 = vdwg.mxu0
    %v153 = vadd.f32 %v78, %v150
    %v154 = vtanh.pop %v153
    %v155 = vxor.u32 %v153, 2147483648
    %v156 = vmul.f32 %v155, 1.442695
    %v157 = vpow.pop %v156
    %v158 = vadd.f32 %v157, 1.0
    %v159 = vrcp.pop %v158
    %v160 = vmul.f32 1.0, %v159
    %v161 = vsel %vm75, %v154, %v160
    %163 = vrot.lane.b32.xlu0 %v77, 32
    %v164 = vpop.permute.xlu0 %163
    %v166 = vmul.f32 %v161, %v164
    %168 = vrot.lane.b32.xlu0 %v161, 64
    %v169 = vpop.permute.xlu0 %168
    %v171 = vmul.f32 %v161, %v169
    %173 = vrot.lane.b32.xlu0 %v171, 32
    %v174 = vpop.permute.xlu0 %173
    %v176 = vadd.f32 %v166, %v174
    %v177 = vtanh.pop %v176
    %179 = vrot.lane.b32.xlu0 %v177, 64
    %v180 = vpop.permute.xlu0 %179
    %v182 = vmul.f32 %v161, %v180
    %s183 = scalar_lea.vmem [#allocation4], 2
    %v184 = vld [vmem:[%s183] sm:$0x3]
    %186 = vrot.lane.b32.xlu0 %v182, 32
    %v187 = vpop.permute.xlu0 %186
    %v188 = vsel %vm79, %v187, 0
    %190 = vmatprep.subr.mxu0 0.0
    %191 = vmatpush1.msra.mxu0 %v67
    %192 = vmatprep.subr.mxu0 0.0
    %193 = vmatpush1.msra.mxu0 %v68
    %194 = vmatprep.subr.mxu0 0.0
    %195 = vmatpush1.msra.mxu0 %v69
    %196 = vmatprep.subr.mxu0 0.0
    %197 = vmatpush1.msra.mxu0 %v70
    %198 = vmatprep.subr.mxu0 0.0
    %199 = vmatpush1.msra.mxu0 0.0
    %200 = vmatprep.subr.mxu0 0.0
    %201 = vmatpush1.msra.mxu0 0.0
    %202 = vmatprep.subr.mxu0 0.0
    %203 = vmatpush1.msra.mxu0 0.0
    %204 = vmatprep.subr.mxu0 0.0
    %205 = vmatpush1.msra.mxu0 0.0
    %206 = vmatprep.subr.mxu0 0.0
    %207 = vmatpush1.msra.mxu0 0.0
    %208 = vmatprep.subr.mxu0 0.0
    %209 = vmatpush1.msra.mxu0 0.0
    %210 = vmatprep.subr.mxu0 0.0
    %211 = vmatpush1.msra.mxu0 0.0
    %212 = vmatprep.subr.mxu0 0.0
    %213 = vmatpush1.msra.mxu0 0.0
    %214 = vmatprep.subr.mxu0 0.0
    %215 = vmatpush1.msra.mxu0 0.0
    %216 = vmatprep.subr.mxu0 0.0
    %217 = vmatpush1.msra.mxu0 0.0
    %218 = vmatprep.subr.mxu0 0.0
    %219 = vmatpush1.msra.mxu0 0.0
    %220 = vmatprep.subr.mxu0 0.0
    %221 = vmatpush1.msra.mxu0 0.0
    %222 = vmatprep.subr.mxu0 0.0
    %223 = vmatpush1.msra.mxu0 0.0
    %224 = vmatprep.subr.mxu0 0.0
    %225 = vmatpush1.msra.mxu0 0.0
    %226 = vmatprep.subr.mxu0 0.0
    %227 = vmatpush1.msra.mxu0 0.0
    %228 = vmatprep.subr.mxu0 0.0
    %229 = vmatpush1.msra.mxu0 0.0
    %230 = vmatprep.subr.mxu0 0.0
    %231 = vmatpush1.msra.mxu0 0.0
    %232 = vmatprep.subr.mxu0 0.0
    %233 = vmatpush1.msra.mxu0 0.0
    %234 = vmatprep.subr.mxu0 0.0
    %235 = vmatpush1.msra.mxu0 0.0
    %236 = vmatprep.subr.mxu0 0.0
    %237 = vmatpush1.msra.mxu0 0.0
    %238 = vmatprep.subr.mxu0 0.0
    %239 = vmatpush1.msra.mxu0 0.0
    %240 = vmatprep.subr.mxu0 0.0
    %241 = vmatpush1.msra.mxu0 0.0
    %242 = vmatprep.subr.mxu0 0.0
    %243 = vmatpush1.msra.mxu0 0.0
    %244 = vmatprep.subr.mxu0 0.0
    %245 = vmatpush1.msra.mxu0 0.0
    %246 = vmatprep.subr.mxu0 0.0
    %247 = vmatpush1.msra.mxu0 0.0
    %248 = vmatprep.subr.mxu0 0.0
    %249 = vmatpush1.msra.mxu0 0.0
    %250 = vmatprep.subr.mxu0 0.0
    %251 = vmatpush1.msra.mxu0 0.0
    %252 = vmatprep.subr.mxu0 0.0
    %253 = vmatpush1.msra.mxu0 0.0
    %254 = vmatprep.mubr.f32.mxu0 0.0
    %255 = vmatmul.mubr.f32.gmra.mrb[0].mxu0 %v188
    %v256 = vpop.f32.mrb[0].mxu0
    %v257 = vadd.f32 0.0, %v256
    %v258 = vpop.f32.mrb[0].mxu0
    %259 = vdwg.mxu0
    %v260 = vadd.f32 %v184, %v257
    %v261 = vtanh.pop %v260
    %v262 = vxor.u32 %v260, 2147483648
    %v263 = vmul.f32 %v262, 1.442695
    %v264 = vpow.pop %v263
    %v265 = vadd.f32 %v264, 1.0
    %v266 = vrcp.pop %v265
    %v267 = vmul.f32 1.0, %v266
    %v268 = vsel %vm75, %v261, %v267
    %v269 = vmul.f32 %v268, %v176
    %271 = vrot.lane.b32.xlu0 %v268, 64
    %v272 = vpop.permute.xlu0 %271
    %v274 = vmul.f32 %v268, %v272
    %276 = vrot.lane.b32.xlu0 %v274, 32
    %v277 = vpop.permute.xlu0 %276
    %v279 = vadd.f32 %v269, %v277
    %v280 = vtanh.pop %v279
    %282 = vrot.lane.b32.xlu0 %v280, 64
    %v283 = vpop.permute.xlu0 %282
    %v285 = vmul.f32 %v268, %v283
    %s286 = scalar_lea.vmem [#allocation4], 4
    %v287 = vld [vmem:[%s286] sm:$0x3]
    %289 = vrot.lane.b32.xlu0 %v285, 32
    %v290 = vpop.permute.xlu0 %289
    %v291 = vsel %vm79, %v290, 0
    %293 = vmatprep.subr.mxu0 0.0
    %294 = vmatpush1.msra.mxu0 %v67
    %295 = vmatprep.subr.mxu0 0.0
    %296 = vmatpush1.msra.mxu0 %v68
    %297 = vmatprep.subr.mxu0 0.0
    %298 = vmatpush1.msra.mxu0 %v69
    %299 = vmatprep.subr.mxu0 0.0
    %300 = vmatpush1.msra.mxu0 %v70
    %301 = vmatprep.subr.mxu0 0.0
    %302 = vmatpush1.msra.mxu0 0.0
    %303 = vmatprep.subr.mxu0 0.0
    %304 = vmatpush1.msra.mxu0 0.0
    %305 = vmatprep.subr.mxu0 0.0
    %306 = vmatpush1.msra.mxu0 0.0
    %307 = vmatprep.subr.mxu0 0.0
    %308 = vmatpush1.msra.mxu0 0.0
    %309 = vmatprep.subr.mxu0 0.0
    %310 = vmatpush1.msra.mxu0 0.0
    %311 = vmatprep.subr.mxu0 0.0
    %312 = vmatpush1.msra.mxu0 0.0
    %313 = vmatprep.subr.mxu0 0.0
    %314 = vmatpush1.msra.mxu0 0.0
    %315 = vmatprep.subr.mxu0 0.0
    %316 = vmatpush1.msra.mxu0 0.0
    %317 = vmatprep.subr.mxu0 0.0
    %318 = vmatpush1.msra.mxu0 0.0
    %319 = vmatprep.subr.mxu0 0.0
    %320 = vmatpush1.msra.mxu0 0.0
    %321 = vmatprep.subr.mxu0 0.0
    %322 = vmatpush1.msra.mxu0 0.0
    %323 = vmatprep.subr.mxu0 0.0
    %324 = vmatpush1.msra.mxu0 0.0
    %325 = vmatprep.subr.mxu0 0.0
    %326 = vmatpush1.msra.mxu0 0.0
    %327 = vmatprep.subr.mxu0 0.0
    %328 = vmatpush1.msra.mxu0 0.0
    %329 = vmatprep.subr.mxu0 0.0
    %330 = vmatpush1.msra.mxu0 0.0
    %331 = vmatprep.subr.mxu0 0.0
    %332 = vmatpush1.msra.mxu0 0.0
    %333 = vmatprep.subr.mxu0 0.0
    %334 = vmatpush1.msra.mxu0 0.0
    %335 = vmatprep.subr.mxu0 0.0
    %336 = vmatpush1.msra.mxu0 0.0
    %337 = vmatprep.subr.mxu0 0.0
    %338 = vmatpush1.msra.mxu0 0.0
    %339 = vmatprep.subr.mxu0 0.0
    %340 = vmatpush1.msra.mxu0 0.0
    %341 = vmatprep.subr.mxu0 0.0
    %342 = vmatpush1.msra.mxu0 0.0
    %343 = vmatprep.subr.mxu0 0.0
    %344 = vmatpush1.msra.mxu0 0.0
    %345 = vmatprep.subr.mxu0 0.0
    %346 = vmatpush1.msra.mxu0 0.0
    %347 = vmatprep.subr.mxu0 0.0
    %348 = vmatpush1.msra.mxu0 0.0
    %349 = vmatprep.subr.mxu0 0.0
    %350 = vmatpush1.msra.mxu0 0.0
    %351 = vmatprep.subr.mxu0 0.0
    %352 = vmatpush1.msra.mxu0 0.0
    %353 = vmatprep.subr.mxu0 0.0
    %354 = vmatpush1.msra.mxu0 0.0
    %355 = vmatprep.subr.mxu0 0.0
    %356 = vmatpush1.msra.mxu0 0.0
    %357 = vmatprep.mubr.f32.mxu0 0.0
    %358 = vmatmul.mubr.f32.gmra.mrb[0].mxu0 %v291
    %v359 = vpop.f32.mrb[0].mxu0
    %v360 = vadd.f32 0.0, %v359
    %v361 = vpop.f32.mrb[0].mxu0
    %362 = vdwg.mxu0
    %v363 = vadd.f32 %v287, %v360
    %v364 = vtanh.pop %v363
    %v365 = vxor.u32 %v363, 2147483648
    %v366 = vmul.f32 %v365, 1.442695
    %v367 = vpow.pop %v366
    %v368 = vadd.f32 %v367, 1.0
    %v369 = vrcp.pop %v368
    %v370 = vmul.f32 1.0, %v369
    %v371 = vsel %vm75, %v364, %v370
    %v372 = vmul.f32 %v371, %v279
    %374 = vrot.lane.b32.xlu0 %v371, 64
    %v375 = vpop.permute.xlu0 %374
    %v377 = vmul.f32 %v371, %v375
    %379 = vrot.lane.b32.xlu0 %v377, 32
    %v380 = vpop.permute.xlu0 %379
    %v382 = vadd.f32 %v372, %v380
    %v383 = vtanh.pop %v382
    %385 = vrot.lane.b32.xlu0 %v383, 64
    %v386 = vpop.permute.xlu0 %385
    %v388 = vmul.f32 %v371, %v386
    %s389 = scalar_lea.vmem [#allocation4], 6
    %v390 = vld [vmem:[%s389] sm:$0x3]
    %392 = vrot.lane.b32.xlu0 %v388, 32
    %v393 = vpop.permute.xlu0 %392
    %v394 = vsel %vm79, %v393, 0
    %396 = vmatprep.subr.mxu0 0.0
    %397 = vmatpush1.msra.mxu0 %v67
    %398 = vmatprep.subr.mxu0 0.0
    %399 = vmatpush1.msra.mxu0 %v68
    %400 = vmatprep.subr.mxu0 0.0
    %401 = vmatpush1.msra.mxu0 %v69
    %402 = vmatprep.subr.mxu0 0.0
    %403 = vmatpush1.msra.mxu0 %v70
    %404 = vmatprep.subr.mxu0 0.0
    %405 = vmatpush1.msra.mxu0 0.0
    %406 = vmatprep.subr.mxu0 0.0
    %407 = vmatpush1.msra.mxu0 0.0
    %408 = vmatprep.subr.mxu0 0.0
    %409 = vmatpush1.msra.mxu0 0.0
    %410 = vmatprep.subr.mxu0 0.0
    %411 = vmatpush1.msra.mxu0 0.0
    %412 = vmatprep.subr.mxu0 0.0
    %413 = vmatpush1.msra.mxu0 0.0
    %414 = vmatprep.subr.mxu0 0.0
    %415 = vmatpush1.msra.mxu0 0.0
    %416 = vmatprep.subr.mxu0 0.0
    %417 = vmatpush1.msra.mxu0 0.0
    %418 = vmatprep.subr.mxu0 0.0
    %419 = vmatpush1.msra.mxu0 0.0
    %420 = vmatprep.subr.mxu0 0.0
    %421 = vmatpush1.msra.mxu0 0.0
    %422 = vmatprep.subr.mxu0 0.0
    %423 = vmatpush1.msra.mxu0 0.0
    %424 = vmatprep.subr.mxu0 0.0
    %425 = vmatpush1.msra.mxu0 0.0
    %426 = vmatprep.subr.mxu0 0.0
    %427 = vmatpush1.msra.mxu0 0.0
    %428 = vmatprep.subr.mxu0 0.0
    %429 = vmatpush1.msra.mxu0 0.0
    %430 = vmatprep.subr.mxu0 0.0
    %431 = vmatpush1.msra.mxu0 0.0
    %432 = vmatprep.subr.mxu0 0.0
    %433 = vmatpush1.msra.mxu0 0.0
    %434 = vmatprep.subr.mxu0 0.0
    %435 = vmatpush1.msra.mxu0 0.0
    %436 = vmatprep.subr.mxu0 0.0
    %437 = vmatpush1.msra.mxu0 0.0
    %438 = vmatprep.subr.mxu0 0.0
    %439 = vmatpush1.msra.mxu0 0.0
    %440 = vmatprep.subr.mxu0 0.0
    %441 = vmatpush1.msra.mxu0 0.0
    %442 = vmatprep.subr.mxu0 0.0
    %443 = vmatpush1.msra.mxu0 0.0
    %444 = vmatprep.subr.mxu0 0.0
    %445 = vmatpush1.msra.mxu0 0.0
    %446 = vmatprep.subr.mxu0 0.0
    %447 = vmatpush1.msra.mxu0 0.0
    %448 = vmatprep.subr.mxu0 0.0
    %449 = vmatpush1.msra.mxu0 0.0
    %450 = vmatprep.subr.mxu0 0.0
    %451 = vmatpush1.msra.mxu0 0.0
    %452 = vmatprep.subr.mxu0 0.0
    %453 = vmatpush1.msra.mxu0 0.0
    %454 = vmatprep.subr.mxu0 0.0
    %455 = vmatpush1.msra.mxu0 0.0
    %456 = vmatprep.subr.mxu0 0.0
    %457 = vmatpush1.msra.mxu0 0.0
    %458 = vmatprep.subr.mxu0 0.0
    %459 = vmatpush1.msra.mxu0 0.0
    %460 = vmatprep.mubr.f32.mxu0 0.0
    %461 = vmatmul.mubr.f32.gmra.mrb[0].mxu0 %v394
    %v462 = vpop.f32.mrb[0].mxu0
    %v463 = vadd.f32 0.0, %v462
    %v464 = vpop.f32.mrb[0].mxu0
    %465 = vdwg.mxu0
    %v466 = vadd.f32 %v390, %v463
    %v467 = vtanh.pop %v466
    %v468 = vxor.u32 %v466, 2147483648
    %v469 = vmul.f32 %v468, 1.442695
    %v470 = vpow.pop %v469
    %v471 = vadd.f32 %v470, 1.0
    %v472 = vrcp.pop %v471
    %v473 = vmul.f32 1.0, %v472
    %v474 = vsel %vm75, %v467, %v473
    %v475 = vmul.f32 %v474, %v382
    %477 = vrot.lane.b32.xlu0 %v474, 64
    %v478 = vpop.permute.xlu0 %477
    %v480 = vmul.f32 %v474, %v478
    %482 = vrot.lane.b32.xlu0 %v480, 32
    %v483 = vpop.permute.xlu0 %482
    %v485 = vadd.f32 %v475, %v483
    %v486 = vtanh.pop %v485
    %488 = vrot.lane.b32.xlu0 %v486, 64
    %v489 = vpop.permute.xlu0 %488
    %v491 = vmul.f32 %v474, %v489
    %s492 = scalar_lea.vmem [#allocation4], 8
    %v493 = vld [vmem:[%s492] sm:$0x3]
    %495 = vrot.lane.b32.xlu0 %v491, 32
    %v496 = vpop.permute.xlu0 %495
    %v497 = vsel %vm79, %v496, 0
    %499 = vmatprep.subr.mxu0 0.0
    %500 = vmatpush1.msra.mxu0 %v67
    %501 = vmatprep.subr.mxu0 0.0
    %502 = vmatpush1.msra.mxu0 %v68
    %503 = vmatprep.subr.mxu0 0.0
    %504 = vmatpush1.msra.mxu0 %v69
    %505 = vmatprep.subr.mxu0 0.0
    %506 = vmatpush1.msra.mxu0 %v70
    %507 = vmatprep.subr.mxu0 0.0
    %508 = vmatpush1.msra.mxu0 0.0
    %509 = vmatprep.subr.mxu0 0.0
    %510 = vmatpush1.msra.mxu0 0.0
    %511 = vmatprep.subr.mxu0 0.0
    %512 = vmatpush1.msra.mxu0 0.0
    %513 = vmatprep.subr.mxu0 0.0
    %514 = vmatpush1.msra.mxu0 0.0
    %515 = vmatprep.subr.mxu0 0.0
    %516 = vmatpush1.msra.mxu0 0.0
    %517 = vmatprep.subr.mxu0 0.0
    %518 = vmatpush1.msra.mxu0 0.0
    %519 = vmatprep.subr.mxu0 0.0
    %520 = vmatpush1.msra.mxu0 0.0
    %521 = vmatprep.subr.mxu0 0.0
    %522 = vmatpush1.msra.mxu0 0.0
    %523 = vmatprep.subr.mxu0 0.0
    %524 = vmatpush1.msra.mxu0 0.0
    %525 = vmatprep.subr.mxu0 0.0
    %526 = vmatpush1.msra.mxu0 0.0
    %527 = vmatprep.subr.mxu0 0.0
    %528 = vmatpush1.msra.mxu0 0.0
    %529 = vmatprep.subr.mxu0 0.0
    %530 = vmatpush1.msra.mxu0 0.0
    %531 = vmatprep.subr.mxu0 0.0
    %532 = vmatpush1.msra.mxu0 0.0
    %533 = vmatprep.subr.mxu0 0.0
    %534 = vmatpush1.msra.mxu0 0.0
    %535 = vmatprep.subr.mxu0 0.0
    %536 = vmatpush1.msra.mxu0 0.0
    %537 = vmatprep.subr.mxu0 0.0
    %538 = vmatpush1.msra.mxu0 0.0
    %539 = vmatprep.subr.mxu0 0.0
    %540 = vmatpush1.msra.mxu0 0.0
    %541 = vmatprep.subr.mxu0 0.0
    %542 = vmatpush1.msra.mxu0 0.0
    %543 = vmatprep.subr.mxu0 0.0
    %544 = vmatpush1.msra.mxu0 0.0
    %545 = vmatprep.subr.mxu0 0.0
    %546 = vmatpush1.msra.mxu0 0.0
    %547 = vmatprep.subr.mxu0 0.0
    %548 = vmatpush1.msra.mxu0 0.0
    %549 = vmatprep.subr.mxu0 0.0
    %550 = vmatpush1.msra.mxu0 0.0
    %551 = vmatprep.subr.mxu0 0.0
    %552 = vmatpush1.msra.mxu0 0.0
    %553 = vmatprep.subr.mxu0 0.0
    %554 = vmatpush1.msra.mxu0 0.0
    %555 = vmatprep.subr.mxu0 0.0
    %556 = vmatpush1.msra.mxu0 0.0
    %557 = vmatprep.subr.mxu0 0.0
    %558 = vmatpush1.msra.mxu0 0.0
    %559 = vmatprep.subr.mxu0 0.0
    %560 = vmatpush1.msra.mxu0 0.0
    %561 = vmatprep.subr.mxu0 0.0
    %562 = vmatpush1.msra.mxu0 0.0
    %563 = vmatprep.mubr.f32.mxu0 0.0
    %564 = vmatmul.mubr.f32.gmra.mrb[0].mxu0 %v497
    %v565 = vpop.f32.mrb[0].mxu0
    %v566 = vadd.f32 0.0, %v565
    %v567 = vpop.f32.mrb[0].mxu0
    %568 = vdwg.mxu0
    %v569 = vadd.f32 %v493, %v566
    %v570 = vtanh.pop %v569
    %v571 = vxor.u32 %v569, 2147483648
    %v572 = vmul.f32 %v571, 1.442695
    %v573 = vpow.pop %v572
    %v574 = vadd.f32 %v573, 1.0
    %v575 = vrcp.pop %v574
    %v576 = vmul.f32 1.0, %v575
    %v577 = vsel %vm75, %v570, %v576
    %v578 = vmul.f32 %v577, %v485
    %580 = vrot.lane.b32.xlu0 %v577, 64
    %v581 = vpop.permute.xlu0 %580
    %v583 = vmul.f32 %v577, %v581
    %585 = vrot.lane.b32.xlu0 %v583, 32
    %v586 = vpop.permute.xlu0 %585
    %v588 = vadd.f32 %v578, %v586
    %v589 = vtanh.pop %v588
    %591 = vrot.lane.b32.xlu0 %v589, 64
    %v592 = vpop.permute.xlu0 %591
    %v594 = vmul.f32 %v577, %v592
    %s595 = scalar_lea.vmem [#allocation4], 10
    %v596 = vld [vmem:[%s595] sm:$0x3]
    %598 = vrot.lane.b32.xlu0 %v594, 32
    %v599 = vpop.permute.xlu0 %598
    %v600 = vsel %vm79, %v599, 0
    %602 = vmatprep.subr.mxu0 0.0
    %603 = vmatpush1.msra.mxu0 %v67
    %604 = vmatprep.subr.mxu0 0.0
    %605 = vmatpush1.msra.mxu0 %v68
    %606 = vmatprep.subr.mxu0 0.0
    %607 = vmatpush1.msra.mxu0 %v69
    %608 = vmatprep.subr.mxu0 0.0
    %609 = vmatpush1.msra.mxu0 %v70
    %610 = vmatprep.subr.mxu0 0.0
    %611 = vmatpush1.msra.mxu0 0.0
    %612 = vmatprep.subr.mxu0 0.0
    %613 = vmatpush1.msra.mxu0 0.0
    %614 = vmatprep.subr.mxu0 0.0
    %615 = vmatpush1.msra.mxu0 0.0
    %616 = vmatprep.subr.mxu0 0.0
    %617 = vmatpush1.msra.mxu0 0.0
    %618 = vmatprep.subr.mxu0 0.0
    %619 = vmatpush1.msra.mxu0 0.0
    %620 = vmatprep.subr.mxu0 0.0
    %621 = vmatpush1.msra.mxu0 0.0
    %622 = vmatprep.subr.mxu0 0.0
    %623 = vmatpush1.msra.mxu0 0.0
    %624 = vmatprep.subr.mxu0 0.0
    %625 = vmatpush1.msra.mxu0 0.0
    %626 = vmatprep.subr.mxu0 0.0
    %627 = vmatpush1.msra.mxu0 0.0
    %628 = vmatprep.subr.mxu0 0.0
    %629 = vmatpush1.msra.mxu0 0.0
    %630 = vmatprep.subr.mxu0 0.0
    %631 = vmatpush1.msra.mxu0 0.0
    %632 = vmatprep.subr.mxu0 0.0
    %633 = vmatpush1.msra.mxu0 0.0
    %634 = vmatprep.subr.mxu0 0.0
    %635 = vmatpush1.msra.mxu0 0.0
    %636 = vmatprep.subr.mxu0 0.0
    %637 = vmatpush1.msra.mxu0 0.0
    %638 = vmatprep.subr.mxu0 0.0
    %639 = vmatpush1.msra.mxu0 0.0
    %640 = vmatprep.subr.mxu0 0.0
    %641 = vmatpush1.msra.mxu0 0.0
    %642 = vmatprep.subr.mxu0 0.0
    %643 = vmatpush1.msra.mxu0 0.0
    %644 = vmatprep.subr.mxu0 0.0
    %645 = vmatpush1.msra.mxu0 0.0
    %646 = vmatprep.subr.mxu0 0.0
    %647 = vmatpush1.msra.mxu0 0.0
    %648 = vmatprep.subr.mxu0 0.0
    %649 = vmatpush1.msra.mxu0 0.0
    %650 = vmatprep.subr.mxu0 0.0
    %651 = vmatpush1.msra.mxu0 0.0
    %652 = vmatprep.subr.mxu0 0.0
    %653 = vmatpush1.msra.mxu0 0.0
    %654 = vmatprep.subr.mxu0 0.0
    %655 = vmatpush1.msra.mxu0 0.0
    %656 = vmatprep.subr.mxu0 0.0
    %657 = vmatpush1.msra.mxu0 0.0
    %658 = vmatprep.subr.mxu0 0.0
    %659 = vmatpush1.msra.mxu0 0.0
    %660 = vmatprep.subr.mxu0 0.0
    %661 = vmatpush1.msra.mxu0 0.0
    %662 = vmatprep.subr.mxu0 0.0
    %663 = vmatpush1.msra.mxu0 0.0
    %664 = vmatprep.subr.mxu0 0.0
    %665 = vmatpush1.msra.mxu0 0.0
    %666 = vmatprep.mubr.f32.mxu0 0.0
    %667 = vmatmul.mubr.f32.gmra.mrb[0].mxu0 %v600
    %v668 = vpop.f32.mrb[0].mxu0
    %v669 = vadd.f32 0.0, %v668
    %v670 = vpop.f32.mrb[0].mxu0
    %671 = vdwg.mxu0
    %v672 = vadd.f32 %v596, %v669
    %v673 = vtanh.pop %v672
    %v674 = vxor.u32 %v672, 2147483648
    %v675 = vmul.f32 %v674, 1.442695
    %v676 = vpow.pop %v675
    %v677 = vadd.f32 %v676, 1.0
    %v678 = vrcp.pop %v677
    %v679 = vmul.f32 1.0, %v678
    %v680 = vsel %vm75, %v673, %v679
    %v681 = vmul.f32 %v680, %v588
    %683 = vrot.lane.b32.xlu0 %v680, 64
    %v684 = vpop.permute.xlu0 %683
    %v686 = vmul.f32 %v680, %v684
    %688 = vrot.lane.b32.xlu0 %v686, 32
    %v689 = vpop.permute.xlu0 %688
    %v691 = vadd.f32 %v681, %v689
    %v692 = vtanh.pop %v691
    %694 = vrot.lane.b32.xlu0 %v692, 64
    %v695 = vpop.permute.xlu0 %694
    %v697 = vmul.f32 %v680, %v695
    %s698 = scalar_lea.vmem [#allocation4], 12
    %v699 = vld [vmem:[%s698] sm:$0x3]
    %701 = vrot.lane.b32.xlu0 %v697, 32
    %v702 = vpop.permute.xlu0 %701
    %v703 = vsel %vm79, %v702, 0
    %705 = vmatprep.subr.mxu0 0.0
    %706 = vmatpush1.msra.mxu0 %v67
    %707 = vmatprep.subr.mxu0 0.0
    %708 = vmatpush1.msra.mxu0 %v68
    %709 = vmatprep.subr.mxu0 0.0
    %710 = vmatpush1.msra.mxu0 %v69
    %711 = vmatprep.subr.mxu0 0.0
    %712 = vmatpush1.msra.mxu0 %v70
    %713 = vmatprep.subr.mxu0 0.0
    %714 = vmatpush1.msra.mxu0 0.0
    %715 = vmatprep.subr.mxu0 0.0
    %716 = vmatpush1.msra.mxu0 0.0
    %717 = vmatprep.subr.mxu0 0.0
    %718 = vmatpush1.msra.mxu0 0.0
    %719 = vmatprep.subr.mxu0 0.0
    %720 = vmatpush1.msra.mxu0 0.0
    %721 = vmatprep.subr.mxu0 0.0
    %722 = vmatpush1.msra.mxu0 0.0
    %723 = vmatprep.subr.mxu0 0.0
    %724 = vmatpush1.msra.mxu0 0.0
    %725 = vmatprep.subr.mxu0 0.0
    %726 = vmatpush1.msra.mxu0 0.0
    %727 = vmatprep.subr.mxu0 0.0
    %728 = vmatpush1.msra.mxu0 0.0
    %729 = vmatprep.subr.mxu0 0.0
    %730 = vmatpush1.msra.mxu0 0.0
    %731 = vmatprep.subr.mxu0 0.0
    %732 = vmatpush1.msra.mxu0 0.0
    %733 = vmatprep.subr.mxu0 0.0
    %734 = vmatpush1.msra.mxu0 0.0
    %735 = vmatprep.subr.mxu0 0.0
    %736 = vmatpush1.msra.mxu0 0.0
    %737 = vmatprep.subr.mxu0 0.0
    %738 = vmatpush1.msra.mxu0 0.0
    %739 = vmatprep.subr.mxu0 0.0
    %740 = vmatpush1.msra.mxu0 0.0
    %741 = vmatprep.subr.mxu0 0.0
    %742 = vmatpush1.msra.mxu0 0.0
    %743 = vmatprep.subr.mxu0 0.0
    %744 = vmatpush1.msra.mxu0 0.0
    %745 = vmatprep.subr.mxu0 0.0
    %746 = vmatpush1.msra.mxu0 0.0
    %747 = vmatprep.subr.mxu0 0.0
    %748 = vmatpush1.msra.mxu0 0.0
    %749 = vmatprep.subr.mxu0 0.0
    %750 = vmatpush1.msra.mxu0 0.0
    %751 = vmatprep.subr.mxu0 0.0
    %752 = vmatpush1.msra.mxu0 0.0
    %753 = vmatprep.subr.mxu0 0.0
    %754 = vmatpush1.msra.mxu0 0.0
    %755 = vmatprep.subr.mxu0 0.0
    %756 = vmatpush1.msra.mxu0 0.0
    %757 = vmatprep.subr.mxu0 0.0
    %758 = vmatpush1.msra.mxu0 0.0
    %759 = vmatprep.subr.mxu0 0.0
    %760 = vmatpush1.msra.mxu0 0.0
    %761 = vmatprep.subr.mxu0 0.0
    %762 = vmatpush1.msra.mxu0 0.0
    %763 = vmatprep.subr.mxu0 0.0
    %764 = vmatpush1.msra.mxu0 0.0
    %765 = vmatprep.subr.mxu0 0.0
    %766 = vmatpush1.msra.mxu0 0.0
    %767 = vmatprep.subr.mxu0 0.0
    %768 = vmatpush1.msra.mxu0 0.0
    %769 = vmatprep.mubr.f32.mxu0 0.0
    %770 = vmatmul.mubr.f32.gmra.mrb[0].mxu0 %v703
    %v771 = vpop.f32.mrb[0].mxu0
    %v772 = vadd.f32 0.0, %v771
    %v773 = vpop.f32.mrb[0].mxu0
    %774 = vdwg.mxu0
    %v775 = vadd.f32 %v699, %v772
    %v776 = vtanh.pop %v775
    %v777 = vxor.u32 %v775, 2147483648
    %v778 = vmul.f32 %v777, 1.442695
    %v779 = vpow.pop %v778
    %v780 = vadd.f32 %v779, 1.0
    %v781 = vrcp.pop %v780
    %v782 = vmul.f32 1.0, %v781
    %v783 = vsel %vm75, %v776, %v782
    %v784 = vmul.f32 %v783, %v691
    %786 = vrot.lane.b32.xlu0 %v783, 64
    %v787 = vpop.permute.xlu0 %786
    %v789 = vmul.f32 %v783, %v787
    %791 = vrot.lane.b32.xlu0 %v789, 32
    %v792 = vpop.permute.xlu0 %791
    %v794 = vadd.f32 %v784, %v792
    %v795 = vtanh.pop %v794
    %797 = vrot.lane.b32.xlu0 %v795, 64
    %v798 = vpop.permute.xlu0 %797
    %v800 = vmul.f32 %v783, %v798
    %s801 = scalar_lea.vmem [#allocation4], 14
    %v802 = vld [vmem:[%s801] sm:$0x3]
    %804 = vrot.lane.b32.xlu0 %v800, 32
    %v805 = vpop.permute.xlu0 %804
    %v806 = vsel %vm79, %v805, 0
    %808 = vmatprep.subr.mxu0 0.0
    %809 = vmatpush1.msra.mxu0 %v67
    %810 = vmatprep.subr.mxu0 0.0
    %811 = vmatpush1.msra.mxu0 %v68
    %812 = vmatprep.subr.mxu0 0.0
    %813 = vmatpush1.msra.mxu0 %v69
    %814 = vmatprep.subr.mxu0 0.0
    %815 = vmatpush1.msra.mxu0 %v70
    %816 = vmatprep.subr.mxu0 0.0
    %817 = vmatpush1.msra.mxu0 0.0
    %818 = vmatprep.subr.mxu0 0.0
    %819 = vmatpush1.msra.mxu0 0.0
    %820 = vmatprep.subr.mxu0 0.0
    %821 = vmatpush1.msra.mxu0 0.0
    %822 = vmatprep.subr.mxu0 0.0
    %823 = vmatpush1.msra.mxu0 0.0
    %824 = vmatprep.subr.mxu0 0.0
    %825 = vmatpush1.msra.mxu0 0.0
    %826 = vmatprep.subr.mxu0 0.0
    %827 = vmatpush1.msra.mxu0 0.0
    %828 = vmatprep.subr.mxu0 0.0
    %829 = vmatpush1.msra.mxu0 0.0
    %830 = vmatprep.subr.mxu0 0.0
    %831 = vmatpush1.msra.mxu0 0.0
    %832 = vmatprep.subr.mxu0 0.0
    %833 = vmatpush1.msra.mxu0 0.0
    %834 = vmatprep.subr.mxu0 0.0
    %835 = vmatpush1.msra.mxu0 0.0
    %836 = vmatprep.subr.mxu0 0.0
    %837 = vmatpush1.msra.mxu0 0.0
    %838 = vmatprep.subr.mxu0 0.0
    %839 = vmatpush1.msra.mxu0 0.0
    %840 = vmatprep.subr.mxu0 0.0
    %841 = vmatpush1.msra.mxu0 0.0
    %842 = vmatprep.subr.mxu0 0.0
    %843 = vmatpush1.msra.mxu0 0.0
    %844 = vmatprep.subr.mxu0 0.0
    %845 = vmatpush1.msra.mxu0 0.0
    %846 = vmatprep.subr.mxu0 0.0
    %847 = vmatpush1.msra.mxu0 0.0
    %848 = vmatprep.subr.mxu0 0.0
    %849 = vmatpush1.msra.mxu0 0.0
    %850 = vmatprep.subr.mxu0 0.0
    %851 = vmatpush1.msra.mxu0 0.0
    %852 = vmatprep.subr.mxu0 0.0
    %853 = vmatpush1.msra.mxu0 0.0
    %854 = vmatprep.subr.mxu0 0.0
    %855 = vmatpush1.msra.mxu0 0.0
    %856 = vmatprep.subr.mxu0 0.0
    %857 = vmatpush1.msra.mxu0 0.0
    %858 = vmatprep.subr.mxu0 0.0
    %859 = vmatpush1.msra.mxu0 0.0
    %860 = vmatprep.subr.mxu0 0.0
    %861 = vmatpush1.msra.mxu0 0.0
    %862 = vmatprep.subr.mxu0 0.0
    %863 = vmatpush1.msra.mxu0 0.0
    %864 = vmatprep.subr.mxu0 0.0
    %865 = vmatpush1.msra.mxu0 0.0
    %866 = vmatprep.subr.mxu0 0.0
    %867 = vmatpush1.msra.mxu0 0.0
    %868 = vmatprep.subr.mxu0 0.0
    %869 = vmatpush1.msra.mxu0 0.0
    %870 = vmatprep.subr.mxu0 0.0
    %871 = vmatpush1.msra.mxu0 0.0
    %872 = vmatprep.mubr.f32.mxu0 0.0
    %873 = vmatmul.mubr.f32.gmra.mrb[0].mxu0 %v806
    %v874 = vpop.f32.mrb[0].mxu0
    %v875 = vadd.f32 0.0, %v874
    %v876 = vpop.f32.mrb[0].mxu0
    %877 = vdwg.mxu0
    %v878 = vadd.f32 %v802, %v875
    %v879 = vtanh.pop %v878
    %v880 = vxor.u32 %v878, 2147483648
    %v881 = vmul.f32 %v880, 1.442695
    %v882 = vpow.pop %v881
    %v883 = vadd.f32 %v882, 1.0
    %v884 = vrcp.pop %v883
    %v885 = vmul.f32 1.0, %v884
    %v886 = vsel %vm75, %v879, %v885
    %v887 = vmul.f32 %v886, %v794
    %889 = vrot.lane.b32.xlu0 %v886, 64
    %v890 = vpop.permute.xlu0 %889
    %v892 = vmul.f32 %v886, %v890
    %894 = vrot.lane.b32.xlu0 %v892, 32
    %v895 = vpop.permute.xlu0 %894
    %v897 = vadd.f32 %v887, %v895
    %v898 = vtanh.pop %v897
    %900 = vrot.lane.b32.xlu0 %v898, 64
    %v901 = vpop.permute.xlu0 %900
    %v903 = vmul.f32 %v886, %v901
    %905 = vrot.lane.b32.xlu0 %v903, 32
    %v906 = vpop.permute.xlu0 %905
    %vm908 = vcmask 254976
    %909 = vst.msk [vmem:[#allocation2] sm:$0x3] %vm908, %v906
    %911 = vrot.lane.b32.xlu0 %v897, 96
    %v912 = vpop.permute.xlu0 %911
    %914 = vst.msk [vmem:[#allocation3] sm:$0x3] %vm908, %v912
    // Predicated region
    $region34: #{tpu_custom_call.1} parent=1 // pred_check
      %p915 = pneg %p59
    $region35: #{tpu_custom_call.1} parent=1 // pred_check_branch
      %917 = sbr.rel (%p915) target = $region37
    $region36: #{tpu_custom_call.1} parent=1 // pred_region
      %v918 = vld [vmem:[#allocation9] sm:$0xff]
      %v919 = vld [vmem:[#allocation9 + $0x8] sm:$0xff]
      %v920 = vld [vmem:[#allocation9 + $0x10] sm:$0xff]
      %v921 = vld [vmem:[#allocation9 + $0x18] sm:$0xff]
      %v922 = vld [vmem:[%s3] sm:$0x1]
      %v924 = vlaneseq
      %v925 = vshrl.u32 %v924, 7
      %v926 = vsub.s32 0, %v925
      %v927 = vrot.slane %v922, %v926
      %v929 = vsel %vm79, %v906, 0
      %931 = vmatprep.subr.mxu0 0.0
      %932 = vmatpush1.msra.mxu0 %v918
      %933 = vmatprep.subr.mxu0 0.0
      %934 = vmatpush1.msra.mxu0 %v919
      %935 = vmatprep.subr.mxu0 0.0
      %936 = vmatpush1.msra.mxu0 %v920
      %937 = vmatprep.subr.mxu0 0.0
      %938 = vmatpush1.msra.mxu0 %v921
      %939 = vmatprep.subr.mxu0 0.0
      %940 = vmatpush1.msra.mxu0 0.0
      %941 = vmatprep.subr.mxu0 0.0
      %942 = vmatpush1.msra.mxu0 0.0
      %943 = vmatprep.subr.mxu0 0.0
      %944 = vmatpush1.msra.mxu0 0.0
      %945 = vmatprep.subr.mxu0 0.0
      %946 = vmatpush1.msra.mxu0 0.0
      %947 = vmatprep.subr.mxu0 0.0
      %948 = vmatpush1.msra.mxu0 0.0
      %949 = vmatprep.subr.mxu0 0.0
      %950 = vmatpush1.msra.mxu0 0.0
      %951 = vmatprep.subr.mxu0 0.0
      %952 = vmatpush1.msra.mxu0 0.0
      %953 = vmatprep.subr.mxu0 0.0
      %954 = vmatpush1.msra.mxu0 0.0
      %955 = vmatprep.subr.mxu0 0.0
      %956 = vmatpush1.msra.mxu0 0.0
      %957 = vmatprep.subr.mxu0 0.0
      %958 = vmatpush1.msra.mxu0 0.0
      %959 = vmatprep.subr.mxu0 0.0
      %960 = vmatpush1.msra.mxu0 0.0
      %961 = vmatprep.subr.mxu0 0.0
      %962 = vmatpush1.msra.mxu0 0.0
      %963 = vmatprep.subr.mxu0 0.0
      %964 = vmatpush1.msra.mxu0 0.0
      %965 = vmatprep.subr.mxu0 0.0
      %966 = vmatpush1.msra.mxu0 0.0
      %967 = vmatprep.subr.mxu0 0.0
      %968 = vmatpush1.msra.mxu0 0.0
      %969 = vmatprep.subr.mxu0 0.0
      %970 = vmatpush1.msra.mxu0 0.0
      %971 = vmatprep.subr.mxu0 0.0
      %972 = vmatpush1.msra.mxu0 0.0
      %973 = vmatprep.subr.mxu0 0.0
      %974 = vmatpush1.msra.mxu0 0.0
      %975 = vmatprep.subr.mxu0 0.0
      %976 = vmatpush1.msra.mxu0 0.0
      %977 = vmatprep.subr.mxu0 0.0
      %978 = vmatpush1.msra.mxu0 0.0
      %979 = vmatprep.subr.mxu0 0.0
      %980 = vmatpush1.msra.mxu0 0.0
      %981 = vmatprep.subr.mxu0 0.0
      %982 = vmatpush1.msra.mxu0 0.0
      %983 = vmatprep.subr.mxu0 0.0
      %984 = vmatpush1.msra.mxu0 0.0
      %985 = vmatprep.subr.mxu0 0.0
      %986 = vmatpush1.msra.mxu0 0.0
      %987 = vmatprep.subr.mxu0 0.0
      %988 = vmatpush1.msra.mxu0 0.0
      %989 = vmatprep.subr.mxu0 0.0
      %990 = vmatpush1.msra.mxu0 0.0
      %991 = vmatprep.subr.mxu0 0.0
      %992 = vmatpush1.msra.mxu0 0.0
      %993 = vmatprep.subr.mxu0 0.0
      %994 = vmatpush1.msra.mxu0 0.0
      %995 = vmatprep.mubr.f32.mxu0 0.0
      %996 = vmatmul.mubr.f32.gmra.mrb[0].mxu0 %v929
      %v997 = vpop.f32.mrb[0].mxu0
      %v998 = vadd.f32 %v927, %v997
      %v999 = vpop.f32.mrb[0].mxu0
      %1000 = vdwg.mxu0
      %1001 = vst [vmem:[#allocation10] sm:$0x3] %v998
    $region37: #{tpu_custom_call.1} parent=1 // pred_fallthru
      _
    // Predicated region
    $region38: #{tpu_custom_call.1} parent=1 // pred_check
      _
    $region39: #{tpu_custom_call.1} parent=1 // pred_check_branch
      %1003 = sbr.rel (0) target = $region41
    $region40: #{tpu_custom_call.1} parent=1 // pred_region
      %s1005 = ssub.s32 32, 32
      %1006 = vsyncadd [#allocation6], %s1005
      %s1008 = sshll.u32 [#allocation10], 4
      %s1009 = int_to_ptr.vmem [resolvable:$true] %s1008
      %1011 = dma.vmem_to_hbm [thread:$0]  %s1009, 32, %s4, [#allocation6]
    $region41: #{tpu_custom_call.1} parent=1 // pred_fallthru
      _
    // Predicated region
    $region42: #{tpu_custom_call.1} parent=1 // pred_check
      _
    $region43: #{tpu_custom_call.1} parent=1 // pred_check_branch
      %1013 = sbr.rel (0) target = $region45
    $region44: #{tpu_custom_call.1} parent=1 // pred_region
      %1014 = dma.done [#allocation6], 32
    $region45: #{tpu_custom_call.1} parent=1 // pred_fallthru
      _
    %1015 = vsyncpa [#allocation5], 1
    %1016 = vsyncpa [#allocation8], 1
    %1017 = vsyncpa [#allocation6], 1

</llo_original>
